<compile_context>
chip_gen: v7x
topology: tpu7x:2x2x1
jax: 0.10.0
libtpu: 0.0.40
codegen_flags: <defaults>
</compile_context>

<pallas_src>
import functools

import jax
import jax.numpy as jnp
from jax.experimental import pallas as pl
from jax.experimental.pallas import tpu as pltpu

LANE = 128  # TPU lane width; hidden feature dims are padded up to this.


def mlp_tanh_kernel(x_ref, w1_ref, w2_ref, w3_ref, b_ref, o_ref):
    # Padded weight rows/cols and bias entries are zero, so tanh(0 + 0) = 0
    # keeps the padded hidden lanes zero through every layer; the final layer
    # is only out_dim wide so nothing needs slicing afterwards.
    cdt = w1_ref.dtype                      # bf16 compute, f32 accumulate
    tb = x_ref.shape[0]
    out_dim = o_ref.shape[1]

    w1 = w1_ref[...]
    w2 = w2_ref[...]
    w3 = w3_ref[...]
    b1 = b_ref[0:1, :]
    b2 = b_ref[1:2, :]
    b3 = b_ref[2:3, :out_dim]

    # Two independent sub-chunks -> MXU of chunk B overlaps EUP tanh of chunk A.
    n_chunks = 2 if (tb >= 16 and tb % 16 == 0) else 1
    rows_per = tb // n_chunks
    for c in range(n_chunks):
        rows = pl.ds(c * rows_per, rows_per)
        h = jnp.dot(x_ref[rows, :].astype(cdt), w1,
                    preferred_element_type=jnp.float32)
        h = jnp.tanh(h + b1)
        h = jnp.dot(h.astype(cdt), w2, preferred_element_type=jnp.float32)
        h = jnp.tanh(h + b2)
        h = jnp.dot(h.astype(cdt), w3, preferred_element_type=jnp.float32)
        h = jnp.tanh(h + b3)
        o_ref[rows, :] = h.astype(o_ref.dtype)


def _round_up(n, m):
    return ((n + m - 1) // m) * m


def _cdiv(a, b):
    return -(-a // b)


def _pad2(a, rows, cols, dtype):
    return jnp.zeros((rows, cols), dtype).at[: a.shape[0], : a.shape[1]].set(
        a.astype(dtype))


@functools.partial(jax.jit, static_argnames=("max_batch_tile",))
def mlp_forward(x, params, *, max_batch_tile=1024):
    """x: (B, input_dim) f32; params: list of (W (in,out), b (out,)) per layer."""
    (w1, b1), (w2, b2), (w3, b3) = params
    B, in_dim = x.shape
    out_dim = w3.shape[1]
    D = LANE
    assert max(w1.shape[1], w2.shape[1], w3.shape[1]) <= LANE

    # Batch tiling: rows padded to a sublane multiple, tile capped at
    # max_batch_tile rows; with >1 tile, force an even step count so the
    # "parallel" grid axis can be sharded across v7x's two TensorCores.
    pb = _round_up(B, 8)
    TB = min(max_batch_tile, pb)
    nb = _cdiv(pb, TB)
    if nb > 1 and nb % 2 == 1:
        nb += 1
        TB = _round_up(_cdiv(pb, nb), 8)
    pb = nb * TB

    # Row-pad only (no lane padding of K); cast happens inside the kernel.
    if pb == B:
        xp = x
    else:
        xp = jnp.zeros((pb, in_dim), x.dtype).at[:B, :].set(x)

    cdt = jnp.bfloat16
    w1p = _pad2(w1, in_dim, D, cdt)        # (in_dim, 128)  -- K unpadded
    w2p = _pad2(w2, D, D, cdt)             # (128, 128)
    w3p = _pad2(w3, D, out_dim, cdt)       # (128, out_dim) -- narrow output
    bp = (
        jnp.zeros((3, D), jnp.float32)     # biases stay f32 (added post-accum)
        .at[0, : b1.shape[0]].set(b1)
        .at[1, : b2.shape[0]].set(b2)
        .at[2, : b3.shape[0]].set(b3)
    )

    out_pad = pl.pallas_call(
        mlp_tanh_kernel,
        out_shape=jax.ShapeDtypeStruct((pb, out_dim), jnp.float32),
        grid=(nb,),
        in_specs=[
            pl.BlockSpec((TB, in_dim), lambda i: (i, 0)),    # x tile, true K
            pl.BlockSpec((in_dim, D), lambda i: (0, 0)),     # W1 resident
            pl.BlockSpec((D, D), lambda i: (0, 0)),          # W2 resident
            pl.BlockSpec((D, out_dim), lambda i: (0, 0)),    # W3 resident
            pl.BlockSpec((3, D), lambda i: (0, 0)),          # stacked biases
        ],
        out_specs=pl.BlockSpec((TB, out_dim), lambda i: (i, 0)),
        compiler_params=pltpu.CompilerParams(
            dimension_semantics=("parallel",),
        ),
    )(xp, w1p, w2p, w3p, bp)

    # Only row padding to undo (fuses under jit); lanes are already exact.
    return out_pad[:B, :]


def init_params(key, input_dim, layers_dim=(5, 5, 2)):
    """Deterministic init mimicking nn.Linear default (uniform(-1/sqrt(in), 1/sqrt(in)))."""
    params = []
    last = input_dim
    for dim in layers_dim:
        key, kw, kb = jax.random.split(key, 3)
        bound = 1.0 / jnp.sqrt(jnp.float32(last))
        # Stored as (in, out) so kernel does x @ W (PyTorch stores (out, in), does x @ W.T)
        W = jax.random.uniform(kw, (last, dim), jnp.float32, -bound, bound)
        b = jax.random.uniform(kb, (dim,), jnp.float32, -bound, bound)
        params.append((W, b))
        last = dim
    return params


if __name__ == "__main__":
    key = jax.random.PRNGKey(0)
    k_x, k_p = jax.random.split(key)

    batch, input_dim = 8, 32
    x = jax.random.normal(k_x, (batch, input_dim), jnp.float32)
    params = init_params(k_p, input_dim, layers_dim=(5, 5, 2))

    out = jax.block_until_ready(mlp_forward(x, params))

    # Reference check in plain f32 JAX (kernel uses bf16 inputs / f32 accumulate,
    # so allow a small mixed-precision tolerance on the [-1, 1] tanh outputs).
    ref = x
    for W, b in params:
        ref = jnp.tanh(ref @ W + b)
    assert out.shape == (batch, 2)
    assert out.dtype == jnp.float32
    assert jnp.allclose(out, ref, atol=3e-2, rtol=3e-2)

    print("KERNEL_OK")
</pallas_src>

<mosaic_0001>
module attributes {stable_mosaic.version = 11 : i64} {
  func.func @mlp_tanh_kernel(%arg0: i32, %arg1: memref<8x32xf32, #tpu.memory_space<vmem>>, %arg2: memref<32x128xbf16, #tpu.memory_space<vmem>>, %arg3: memref<128x128xbf16, #tpu.memory_space<vmem>>, %arg4: memref<128x2xbf16, #tpu.memory_space<vmem>>, %arg5: memref<3x128xf32, #tpu.memory_space<vmem>>, %arg6: memref<8x2xf32, #tpu.memory_space<vmem>>) attributes {dimension_semantics = [#tpu.dimension_semantics<parallel>], iteration_bounds = array<i64: 1>, scalar_prefetch = 0 : i64, scratch_operands = 0 : i64, tpu.core_type = #tpu.core_type<tc>, window_params = [{transform_indices = @transform_0, window_bounds = array<i64: 8, 32>}, {pipeline_mode = #tpu.pipeline_mode<synchronous>, transform_indices = @transform_1, window_bounds = array<i64: 32, 128>}, {pipeline_mode = #tpu.pipeline_mode<synchronous>, transform_indices = @transform_2, window_bounds = array<i64: 128, 128>}, {pipeline_mode = #tpu.pipeline_mode<synchronous>, transform_indices = @transform_3, window_bounds = array<i64: 128, 2>}, {pipeline_mode = #tpu.pipeline_mode<synchronous>, transform_indices = @transform_4, window_bounds = array<i64: 3, 128>}, {transform_indices = @transform_5, window_bounds = array<i64: 8, 2>}]} {
    %c0 = arith.constant 0 : index
    %c0_0 = arith.constant 0 : index
    %0 = vector.load %arg2[%c0, %c0_0] : memref<32x128xbf16, #tpu.memory_space<vmem>>, vector<32x128xbf16>
    %c0_1 = arith.constant 0 : index
    %c0_2 = arith.constant 0 : index
    %1 = vector.load %arg3[%c0_1, %c0_2] : memref<128x128xbf16, #tpu.memory_space<vmem>>, vector<128x128xbf16>
    %c0_3 = arith.constant 0 : index
    %c0_4 = arith.constant 0 : index
    %2 = vector.load %arg4[%c0_3, %c0_4] : memref<128x2xbf16, #tpu.memory_space<vmem>>, vector<128x2xbf16>
    %c0_5 = arith.constant 0 : index
    %c0_6 = arith.constant 0 : index
    %3 = vector.load %arg5[%c0_5, %c0_6] : memref<3x128xf32, #tpu.memory_space<vmem>>, vector<1x128xf32>
    %c1 = arith.constant 1 : index
    %c0_7 = arith.constant 0 : index
    %4 = vector.load %arg5[%c1, %c0_7] : memref<3x128xf32, #tpu.memory_space<vmem>>, vector<1x128xf32>
    %c2 = arith.constant 2 : index
    %c0_8 = arith.constant 0 : index
    %5 = vector.load %arg5[%c2, %c0_8] : memref<3x128xf32, #tpu.memory_space<vmem>>, vector<1x2xf32>
    %c0_9 = arith.constant 0 : index
    %c0_10 = arith.constant 0 : index
    %6 = vector.load %arg1[%c0_9, %c0_10] : memref<8x32xf32, #tpu.memory_space<vmem>>, vector<8x32xf32>
    %7 = arith.truncf %6 : vector<8x32xf32> to vector<8x32xbf16>
    %cst = arith.constant dense<0.000000e+00> : vector<8x128xf32>
    %8 = tpu.matmul %7, %0, %cst {dimension_numbers = #tpu.dot_dimension_numbers<[1], [0], [0], [1], [0, 0, 1, 1], [], []>} : vector<8x32xbf16>, vector<32x128xbf16>, vector<8x128xf32> -> vector<8x128xf32>
    %9 = vector.broadcast %3 : vector<1x128xf32> to vector<8x128xf32>
    %10 = arith.addf %8, %9 : vector<8x128xf32>
    %11 = math.tanh %10 : vector<8x128xf32>
    %12 = arith.truncf %11 : vector<8x128xf32> to vector<8x128xbf16>
    %cst_11 = arith.constant dense<0.000000e+00> : vector<8x128xf32>
    %13 = tpu.matmul %12, %1, %cst_11 {dimension_numbers = #tpu.dot_dimension_numbers<[1], [0], [0], [1], [0, 0, 1, 1], [], []>} : vector<8x128xbf16>, vector<128x128xbf16>, vector<8x128xf32> -> vector<8x128xf32>
    %14 = vector.broadcast %4 : vector<1x128xf32> to vector<8x128xf32>
    %15 = arith.addf %13, %14 : vector<8x128xf32>
    %16 = math.tanh %15 : vector<8x128xf32>
    %17 = arith.truncf %16 : vector<8x128xf32> to vector<8x128xbf16>
    %cst_12 = arith.constant dense<0.000000e+00> : vector<8x2xf32>
    %18 = tpu.matmul %17, %2, %cst_12 {dimension_numbers = #tpu.dot_dimension_numbers<[1], [0], [0], [1], [0, 0, 1, 1], [], []>} : vector<8x128xbf16>, vector<128x2xbf16>, vector<8x2xf32> -> vector<8x2xf32>
    %19 = vector.broadcast %5 : vector<1x2xf32> to vector<8x2xf32>
    %20 = arith.addf %18, %19 : vector<8x2xf32>
    %21 = math.tanh %20 : vector<8x2xf32>
    %c0_13 = arith.constant 0 : index
    %c0_14 = arith.constant 0 : index
    %22 = vector.load %arg6[%c0_13, %c0_14] : memref<8x2xf32, #tpu.memory_space<vmem>>, vector<8x2xf32>
    tpu.vector_store %arg6[%c0_13, %c0_14], %21 {strides = array<i32>} : memref<8x2xf32, #tpu.memory_space<vmem>>, vector<8x2xf32>,
    return
  }
  func.func @transform_0(%arg0: i32) -> (i32, i32) {
    %c0_i32 = arith.constant 0 : i32
    %c0_i32_0 = arith.constant 0 : i32
    return %arg0, %c0_i32 : i32, i32
  }
  func.func @transform_1(%arg0: i32) -> (i32, i32) {
    %c0_i32 = arith.constant 0 : i32
    %c0_i32_0 = arith.constant 0 : i32
    %c0_i32_1 = arith.constant 0 : i32
    return %c0_i32, %c0_i32_0 : i32, i32
  }
  func.func @transform_2(%arg0: i32) -> (i32, i32) {
    %c0_i32 = arith.constant 0 : i32
    %c0_i32_0 = arith.constant 0 : i32
    %c0_i32_1 = arith.constant 0 : i32
    return %c0_i32, %c0_i32_0 : i32, i32
  }
  func.func @transform_3(%arg0: i32) -> (i32, i32) {
    %c0_i32 = arith.constant 0 : i32
    %c0_i32_0 = arith.constant 0 : i32
    %c0_i32_1 = arith.constant 0 : i32
    return %c0_i32, %c0_i32_0 : i32, i32
  }
  func.func @transform_4(%arg0: i32) -> (i32, i32) {
    %c0_i32 = arith.constant 0 : i32
    %c0_i32_0 = arith.constant 0 : i32
    %c0_i32_1 = arith.constant 0 : i32
    return %c0_i32, %c0_i32_0 : i32, i32
  }
  func.func @transform_5(%arg0: i32) -> (i32, i32) {
    %c0_i32 = arith.constant 0 : i32
    %c0_i32_0 = arith.constant 0 : i32
    return %arg0, %c0_i32 : i32, i32
  }
}

</mosaic_0001>

<llo_original>
// kernel: mlp_forward.1
$region0: #{mlp_forward.1}
  #allocation0 [shape = 'u32[]', space=smem, size = 0x4, offset = 0x4, fixed_abs, tag = 'smem constant byte address 0x4 - core index']
  #allocation1 [shape = 'u32[144,128]{1,0:T(1,128)}', space=vmem, size = 0x12000, scoped, tag = 'internal scratch']
  %s0 = inlined_call_operand.vmem [shape: f32[8,32], index: 0, kind: input, shape index: {}]
  %s1 = inlined_call_operand.vmem [shape: bf16[32,128], index: 1, kind: input, shape index: {}]
  %s2 = inlined_call_operand.vmem [shape: bf16[128,128], index: 2, kind: input, shape index: {}]
  %s3 = inlined_call_operand.vmem [shape: bf16[128,2], index: 3, kind: input, shape index: {}]
  %s4 = inlined_call_operand.vmem [shape: f32[3,128], index: 4, kind: input, shape index: {}]
  %s5 = inlined_call_operand.vmem [shape: f32[8,2], index: 5, kind: output, shape index: {}]
  %s6 = sld [smem:[#allocation0]]
  $region30: #{mlp_forward.1} parent=0
    _
  %s8 = ssub.s32 1, %s6
  %s9 = scalar_select 0, %s8, %s6
  // Predicated region
  $region2: #{mlp_forward.1} parent=0 // pred_check
    _
  $region3: #{mlp_forward.1} parent=0 // pred_check_branch
    %11 = sbr.rel (0) target = $region5
  $region4: #{mlp_forward.1} parent=0 // pred_region
    _
  $region5: #{mlp_forward.1} parent=0 // pred_fallthru
    _
  // Predicated region
  $region6: #{mlp_forward.1} parent=0 // pred_check
    _
  $region7: #{mlp_forward.1} parent=0 // pred_check_branch
    %13 = sbr.rel (0) target = $region9
  $region8: #{mlp_forward.1} parent=0 // pred_region
    _
  $region9: #{mlp_forward.1} parent=0 // pred_fallthru
    _
  // Predicated region
  $region10: #{mlp_forward.1} parent=0 // pred_check
    _
  $region11: #{mlp_forward.1} parent=0 // pred_check_branch
    %15 = sbr.rel (0) target = $region13
  $region12: #{mlp_forward.1} parent=0 // pred_region
    _
  $region13: #{mlp_forward.1} parent=0 // pred_fallthru
    _
  // Predicated region
  $region14: #{mlp_forward.1} parent=0 // pred_check
    _
  $region15: #{mlp_forward.1} parent=0 // pred_check_branch
    %17 = sbr.rel (0) target = $region17
  $region16: #{mlp_forward.1} parent=0 // pred_region
    _
  $region17: #{mlp_forward.1} parent=0 // pred_fallthru
    _
  // Predicated region
  $region18: #{mlp_forward.1} parent=0 // pred_check
    _
  $region19: #{mlp_forward.1} parent=0 // pred_check_branch
    %19 = sbr.rel (0) target = $region21
  $region20: #{mlp_forward.1} parent=0 // pred_region
    _
  $region21: #{mlp_forward.1} parent=0 // pred_fallthru
    _
  %v21 = vld [vmem:[%s1] sm:$0xf]
  %v22 = vld [vmem:[%s1 + $0x4] sm:$0xf]
  %v23 = vld [vmem:[%s1 + $0x8] sm:$0xf]
  %v24 = vld [vmem:[%s1 + $0xc] sm:$0xf]
  %v25 = vld [vmem:[%s2] sm:$0xf]
  %v26 = vld [vmem:[%s2 + $0x4] sm:$0xf]
  %v27 = vld [vmem:[%s2 + $0x8] sm:$0xf]
  %v28 = vld [vmem:[%s2 + $0xc] sm:$0xf]
  %v29 = vld [vmem:[%s2 + $0x10] sm:$0xf]
  %v30 = vld [vmem:[%s2 + $0x14] sm:$0xf]
  %v31 = vld [vmem:[%s2 + $0x18] sm:$0xf]
  %v32 = vld [vmem:[%s2 + $0x1c] sm:$0xf]
  %v33 = vld [vmem:[%s2 + $0x20] sm:$0xf]
  %v34 = vld [vmem:[%s2 + $0x24] sm:$0xf]
  %v35 = vld [vmem:[%s2 + $0x28] sm:$0xf]
  %v36 = vld [vmem:[%s2 + $0x2c] sm:$0xf]
  %v37 = vld [vmem:[%s2 + $0x30] sm:$0xf]
  %v38 = vld [vmem:[%s2 + $0x34] sm:$0xf]
  %v39 = vld [vmem:[%s2 + $0x38] sm:$0xf]
  %v40 = vld [vmem:[%s2 + $0x3c] sm:$0xf]
  %v41 = vld [vmem:[%s3] sm:$0xf]
  %v42 = vld [vmem:[%s3 + $0x4] sm:$0xf]
  %v43 = vld [vmem:[%s3 + $0x8] sm:$0xf]
  %v44 = vld [vmem:[%s3 + $0xc] sm:$0xf]
  %v45 = vld [vmem:[%s3 + $0x10] sm:$0xf]
  %v46 = vld [vmem:[%s3 + $0x14] sm:$0xf]
  %v47 = vld [vmem:[%s3 + $0x18] sm:$0xf]
  %v48 = vld [vmem:[%s3 + $0x1c] sm:$0xf]
  %v49 = vld [vmem:[%s3 + $0x20] sm:$0xf]
  %v50 = vld [vmem:[%s3 + $0x24] sm:$0xf]
  %v51 = vld [vmem:[%s3 + $0x28] sm:$0xf]
  %v52 = vld [vmem:[%s3 + $0x2c] sm:$0xf]
  %v53 = vld [vmem:[%s3 + $0x30] sm:$0xf]
  %v54 = vld [vmem:[%s3 + $0x34] sm:$0xf]
  %v55 = vld [vmem:[%s3 + $0x38] sm:$0xf]
  %v56 = vld [vmem:[%s3 + $0x3c] sm:$0xf]
  %v57 = vld [vmem:[%s4] sm:$0x1]
  %v58 = vld [vmem:[%s4 + $0x1] sm:$0x1]
  %v59 = vld [vmem:[%s4 + $0x2] sm:$0x1]
  %v60 = vld [vmem:[%s0] sm:$0xff]
  %v61 = vpack.c.bf16 %v60, %v60
  %v62 = vlaneseq
  %v63 = vshrl.u32 %v62, 7
  %v64 = vsub.s32 0, %v63
  %v65 = vrot.slane %v57, %v64
  %v70 = vunpack.c.l.b16 %v21
  %v71 = vunpack.c.l.b16 %v22
  %v72 = vunpack.c.l.b16 %v23
  %v73 = vunpack.c.l.b16 %v24
  %v74 = vpack.c.b16 %v71, %v70
  %v75 = vpack.c.b16 %v73, %v72
  %vm78 = vcmask 261120
  %v80 = vsel %vm78, %v61, 0
  %82 = vmatprep.subr.bf16.mxu0 0
  %83 = vmatpush1.bf16.msra.mxu0 %v74
  %84 = vmatprep.subr.bf16.mxu0 0
  %85 = vmatpush1.bf16.msra.mxu0 %v75
  %86 = vmatprep.subr.bf16.mxu0 0
  %87 = vmatpush1.bf16.msra.mxu0 0
  %88 = vmatprep.subr.bf16.mxu0 0
  %89 = vmatpush1.bf16.msra.mxu0 0
  %90 = vmatprep.subr.bf16.mxu0 0
  %91 = vmatpush1.bf16.msra.mxu0 0
  %92 = vmatprep.subr.bf16.mxu0 0
  %93 = vmatpush1.bf16.msra.mxu0 0
  %94 = vmatprep.subr.bf16.mxu0 0
  %95 = vmatpush1.bf16.msra.mxu0 0
  %96 = vmatprep.subr.bf16.mxu0 0
  %97 = vmatpush1.bf16.msra.mxu0 0
  %98 = vmatprep.subr.bf16.mxu0 0
  %99 = vmatpush1.bf16.msra.mxu0 0
  %100 = vmatprep.subr.bf16.mxu0 0
  %101 = vmatpush1.bf16.msra.mxu0 0
  %102 = vmatprep.subr.bf16.mxu0 0
  %103 = vmatpush1.bf16.msra.mxu0 0
  %104 = vmatprep.subr.bf16.mxu0 0
  %105 = vmatpush1.bf16.msra.mxu0 0
  %106 = vmatprep.subr.bf16.mxu0 0
  %107 = vmatpush1.bf16.msra.mxu0 0
  %108 = vmatprep.subr.bf16.mxu0 0
  %109 = vmatpush1.bf16.msra.mxu0 0
  %110 = vmatprep.subr.bf16.mxu0 0
  %111 = vmatpush1.bf16.msra.mxu0 0
  %112 = vmatprep.subr.bf16.mxu0 0
  %113 = vmatpush1.bf16.msra.mxu0 0
  %114 = vmatprep.mubr.bf16.mxu0 0
  %115 = vmatmul.mubr.bf16.gmra.mrb[0].mxu0 %v80
  %v116 = vpop.f32.mrb[0].mxu0
  %v117 = vadd.f32 %v65, %v116
  %v118 = vpop.f32.mrb[0].mxu0
  %v119 = vpop.f32.mrb[0].mxu0
  %v120 = vpop.f32.mrb[0].mxu0
  %121 = vdwg.mxu0
  %v122 = vtanh.pop %v117
  %v123 = vpack.c.bf16 %v122, %v122
  %v124 = vlaneseq
  %v125 = vshrl.u32 %v124, 7
  %v126 = vsub.s32 0, %v125
  %v127 = vrot.slane %v58, %v126
  %v144 = vunpack.c.l.b16 %v25
  %v145 = vunpack.c.l.b16 %v26
  %v146 = vunpack.c.l.b16 %v27
  %v147 = vunpack.c.l.b16 %v28
  %v148 = vunpack.c.l.b16 %v29
  %v149 = vunpack.c.l.b16 %v30
  %v150 = vunpack.c.l.b16 %v31
  %v151 = vunpack.c.l.b16 %v32
  %v152 = vunpack.c.l.b16 %v33
  %v153 = vunpack.c.l.b16 %v34
  %v154 = vunpack.c.l.b16 %v35
  %v155 = vunpack.c.l.b16 %v36
  %v156 = vunpack.c.l.b16 %v37
  %v157 = vunpack.c.l.b16 %v38
  %v158 = vunpack.c.l.b16 %v39
  %v159 = vunpack.c.l.b16 %v40
  %v160 = vpack.c.b16 %v145, %v144
  %v161 = vpack.c.b16 %v147, %v146
  %v162 = vpack.c.b16 %v149, %v148
  %v163 = vpack.c.b16 %v151, %v150
  %v164 = vpack.c.b16 %v153, %v152
  %v165 = vpack.c.b16 %v155, %v154
  %v166 = vpack.c.b16 %v157, %v156
  %v167 = vpack.c.b16 %v159, %v158
  %176 = vmatprep.subr.bf16.mxu0 0
  %177 = vmatpush1.bf16.msra.mxu0 %v160
  %178 = vmatprep.subr.bf16.mxu0 0
  %179 = vmatpush1.bf16.msra.mxu0 %v161
  %180 = vmatprep.subr.bf16.mxu0 0
  %181 = vmatpush1.bf16.msra.mxu0 %v162
  %182 = vmatprep.subr.bf16.mxu0 0
  %183 = vmatpush1.bf16.msra.mxu0 %v163
  %184 = vmatprep.subr.bf16.mxu0 0
  %185 = vmatpush1.bf16.msra.mxu0 %v164
  %186 = vmatprep.subr.bf16.mxu0 0
  %187 = vmatpush1.bf16.msra.mxu0 %v165
  %188 = vmatprep.subr.bf16.mxu0 0
  %189 = vmatpush1.bf16.msra.mxu0 %v166
  %190 = vmatprep.subr.bf16.mxu0 0
  %191 = vmatpush1.bf16.msra.mxu0 %v167
  %192 = vmatprep.subr.bf16.mxu0 0
  %193 = vmatpush1.bf16.msra.mxu0 0
  %194 = vmatprep.subr.bf16.mxu0 0
  %195 = vmatpush1.bf16.msra.mxu0 0
  %196 = vmatprep.subr.bf16.mxu0 0
  %197 = vmatpush1.bf16.msra.mxu0 0
  %198 = vmatprep.subr.bf16.mxu0 0
  %199 = vmatpush1.bf16.msra.mxu0 0
  %200 = vmatprep.subr.bf16.mxu0 0
  %201 = vmatpush1.bf16.msra.mxu0 0
  %202 = vmatprep.subr.bf16.mxu0 0
  %203 = vmatpush1.bf16.msra.mxu0 0
  %204 = vmatprep.subr.bf16.mxu0 0
  %205 = vmatpush1.bf16.msra.mxu0 0
  %206 = vmatprep.subr.bf16.mxu0 0
  %207 = vmatpush1.bf16.msra.mxu0 0
  %208 = vmatprep.mubr.bf16.mxu0 0
  %209 = vmatmul.mubr.bf16.gmra.mrb[0].mxu0 %v123
  %v210 = vpop.f32.mrb[0].mxu0
  %v211 = vadd.f32 %v127, %v210
  %v212 = vpop.f32.mrb[0].mxu0
  %v213 = vpop.f32.mrb[0].mxu0
  %v214 = vpop.f32.mrb[0].mxu0
  %215 = vdwg.mxu0
  %v216 = vtanh.pop %v211
  %v217 = vpack.c.bf16 %v216, %v216
  %v218 = vlaneseq
  %v219 = vshrl.u32 %v218, 7
  %v220 = vsub.s32 0, %v219
  %v221 = vrot.slane %v59, %v220
  %v238 = vunpack.c.l.b16 %v41
  %v239 = vunpack.c.l.b16 %v42
  %v240 = vunpack.c.l.b16 %v43
  %v241 = vunpack.c.l.b16 %v44
  %v242 = vunpack.c.l.b16 %v45
  %v243 = vunpack.c.l.b16 %v46
  %v244 = vunpack.c.l.b16 %v47
  %v245 = vunpack.c.l.b16 %v48
  %v246 = vunpack.c.l.b16 %v49
  %v247 = vunpack.c.l.b16 %v50
  %v248 = vunpack.c.l.b16 %v51
  %v249 = vunpack.c.l.b16 %v52
  %v250 = vunpack.c.l.b16 %v53
  %v251 = vunpack.c.l.b16 %v54
  %v252 = vunpack.c.l.b16 %v55
  %v253 = vunpack.c.l.b16 %v56
  %v254 = vpack.c.b16 %v239, %v238
  %v255 = vpack.c.b16 %v241, %v240
  %v256 = vpack.c.b16 %v243, %v242
  %v257 = vpack.c.b16 %v245, %v244
  %v258 = vpack.c.b16 %v247, %v246
  %v259 = vpack.c.b16 %v249, %v248
  %v260 = vpack.c.b16 %v251, %v250
  %v261 = vpack.c.b16 %v253, %v252
  %270 = vmatprep.subr.bf16.mxu0 0
  %271 = vmatpush1.bf16.msra.mxu0 %v254
  %272 = vmatprep.subr.bf16.mxu0 0
  %273 = vmatpush1.bf16.msra.mxu0 %v255
  %274 = vmatprep.subr.bf16.mxu0 0
  %275 = vmatpush1.bf16.msra.mxu0 %v256
  %276 = vmatprep.subr.bf16.mxu0 0
  %277 = vmatpush1.bf16.msra.mxu0 %v257
  %278 = vmatprep.subr.bf16.mxu0 0
  %279 = vmatpush1.bf16.msra.mxu0 %v258
  %280 = vmatprep.subr.bf16.mxu0 0
  %281 = vmatpush1.bf16.msra.mxu0 %v259
  %282 = vmatprep.subr.bf16.mxu0 0
  %283 = vmatpush1.bf16.msra.mxu0 %v260
  %284 = vmatprep.subr.bf16.mxu0 0
  %285 = vmatpush1.bf16.msra.mxu0 %v261
  %286 = vmatprep.subr.bf16.mxu0 0
  %287 = vmatpush1.bf16.msra.mxu0 0
  %288 = vmatprep.subr.bf16.mxu0 0
  %289 = vmatpush1.bf16.msra.mxu0 0
  %290 = vmatprep.subr.bf16.mxu0 0
  %291 = vmatpush1.bf16.msra.mxu0 0
  %292 = vmatprep.subr.bf16.mxu0 0
  %293 = vmatpush1.bf16.msra.mxu0 0
  %294 = vmatprep.subr.bf16.mxu0 0
  %295 = vmatpush1.bf16.msra.mxu0 0
  %296 = vmatprep.subr.bf16.mxu0 0
  %297 = vmatpush1.bf16.msra.mxu0 0
  %298 = vmatprep.subr.bf16.mxu0 0
  %299 = vmatpush1.bf16.msra.mxu0 0
  %300 = vmatprep.subr.bf16.mxu0 0
  %301 = vmatpush1.bf16.msra.mxu0 0
  %302 = vmatprep.mubr.bf16.mxu0 0
  %303 = vmatmul.mubr.bf16.gmra.mrb[0].mxu0 %v217
  %v304 = vpop.f32.mrb[0].mxu0
  %v305 = vadd.f32 %v221, %v304
  %v306 = vpop.f32.mrb[0].mxu0
  %v307 = vpop.f32.mrb[0].mxu0
  %v308 = vpop.f32.mrb[0].mxu0
  %309 = vdwg.mxu0
  %v310 = vtanh.pop %v305
  %vm311 = vcmask 15360
  %312 = vst.msk [vmem:[%s5] sm:$0xff] %vm311, %v310
  // Predicated region
  $region22: #{mlp_forward.1} parent=0 // pred_check
    _
  $region23: #{mlp_forward.1} parent=0 // pred_check_branch
    %314 = sbr.rel (0) target = $region25
  $region24: #{mlp_forward.1} parent=0 // pred_region
    _
  $region25: #{mlp_forward.1} parent=0 // pred_fallthru
    _
  // Predicated region
  $region26: #{mlp_forward.1} parent=0 // pred_check
    _
  $region27: #{mlp_forward.1} parent=0 // pred_check_branch
    %316 = sbr.rel (0) target = $region29
  $region28: #{mlp_forward.1} parent=0 // pred_region
    _
  $region29: #{mlp_forward.1} parent=0 // pred_fallthru
    _

</llo_original>
